<compile_context>
chip_gen: v5e
topology: v5e:2x2
jax: 0.10.0
libtpu: 0.0.40
codegen_flags: <defaults>
</compile_context>

<pallas_src>
import jax
import jax.numpy as jnp
from jax.experimental import pallas as pl
from jax.experimental.pallas import tpu as pltpu


# ----------------------------- Pallas kernel ------------------------------ #
def _actor_drr_kernel(
    user_ref,     # VMEM (TB, E)     bf16 gathered user embeddings
    item_ref,     # VMEM (TB, M*E)   bf16 gathered item embeddings, row-flattened
    kron_ref,     # VMEM (M*E, E)    f32 kron(conv_w, I_E)  (1x1 conv as a matmul)
    convb_ref,    # VMEM (1, E)      f32 conv bias broadcast row
    w1_ref,       # VMEM (3E, H)     f32 first Linear weight (whole, no splits)
    b1_ref,       # VMEM (1, H)
    ln_g_ref,     # VMEM (1, H)      LayerNorm gamma
    ln_b_ref,     # VMEM (1, H)      LayerNorm beta
    w2_ref,       # VMEM (H, E)
    b2_ref,       # VMEM (1, E)
    out_ref,      # VMEM (TB, E)     f32
):
    user_emb = user_ref[...].astype(jnp.float32)          # (TB, E)
    item_flat = item_ref[...].astype(jnp.float32)         # (TB, M*E)

    # --- drr_ave: Conv1d(M->1, k=1) == one K=M*E MXU matmul against kron(w, I_E) ---
    drr = (
        jnp.dot(item_flat, kron_ref[...], preferred_element_type=jnp.float32)
        + convb_ref[...]
    )                                                      # (TB, E)

    # --- state = [user_emb, user_emb*drr, drr]; single fused (TB,3E)@(3E,H) matmul ---
    state = jnp.concatenate([user_emb, user_emb * drr, drr], axis=-1)   # (TB, 3E)
    h = jnp.dot(state, w1_ref[...], preferred_element_type=jnp.float32) + b1_ref[...]

    # --- LayerNorm(H): torch default eps=1e-5, biased variance; rsqrt rides the EUP ---
    mean = jnp.mean(h, axis=-1, keepdims=True)
    cent = h - mean
    var = jnp.mean(cent * cent, axis=-1, keepdims=True)
    h = cent * jax.lax.rsqrt(var + 1e-5)
    h = h * ln_g_ref[...] + ln_b_ref[...]

    # --- ReLU ---
    h = jnp.maximum(h, 0.0)

    # --- second Linear (one fused final store, sublane-dense over the batch tile) ---
    out_ref[...] = (
        jnp.dot(h, w2_ref[...], preferred_element_type=jnp.float32) + b2_ref[...]
    )


# ------------------------------- wrapper ----------------------------------- #
def _round_up(x, m):
    return ((x + m - 1) // m) * m


def actor_drr_forward(params, user, memory, *, block_b=256):
    """Embedding gathers + padding in plain JAX, fused MLP in one Pallas kernel."""
    B = user.shape[0]
    M = memory.shape[1]
    E = params["user_emb_table"].shape[1]
    H = params["w1"].shape[1]

    # Batch tile: multiple of 16 for multi-block bf16 operands; a single full-array
    # block (B <= block_b) is always legal regardless of alignment.
    block_b = _round_up(block_b, 16)
    tb = min(block_b, _round_up(B, 8))
    b_pad = _round_up(B, tb)

    # Pad the cheap int32 index arrays (not the gathered tensors); padded rows are
    # computed with valid indices and sliced off at the end.
    user_p = jnp.pad(user, (0, b_pad - B))
    memory_p = jnp.pad(memory, ((0, b_pad - B), (0, 0)))

    # Gathers stay in XLA glue; tables are bf16 so the dominant HBM traffic is halved.
    # TODO(synk): for larger embedding_dim, fuse the gather into the kernel with
    # scalar-prefetched indices + manual pltpu.make_async_copy from tables kept at
    # memory_space=pl.ANY; at E=16 each gathered row is only 64 B, so per-row DMAs
    # would be DMA-latency bound rather than a bandwidth win.
    user_emb = params["user_emb_table"][user_p]                          # (b_pad, E) bf16
    item_flat = params["item_emb_table"][memory_p].reshape(b_pad, M * E)  # (b_pad, M*E) bf16

    batch_spec = lambda shape: pl.BlockSpec(shape, lambda i: (i, 0))
    resident = lambda shape: pl.BlockSpec(shape, lambda i: (0, 0))

    out = pl.pallas_call(
        _actor_drr_kernel,
        out_shape=jax.ShapeDtypeStruct((b_pad, E), jnp.float32),
        grid_spec=pltpu.PrefetchScalarGridSpec(
            num_scalar_prefetch=0,
            grid=(b_pad // tb,),
            in_specs=[
                batch_spec((tb, E)),        # user_emb   (streamed over batch)
                batch_spec((tb, M * E)),    # item_flat  (streamed over batch, lane-dense)
                resident((M * E, E)),       # kron(conv_w, I_E)  (VMEM-resident)
                resident((1, E)),           # conv bias row
                resident((3 * E, H)),       # W1 (whole)
                resident((1, H)),           # b1
                resident((1, H)),           # LN gamma
                resident((1, H)),           # LN beta
                resident((H, E)),           # W2
                resident((1, E)),           # b2
            ],
            out_specs=batch_spec((tb, E)),
        ),
        compiler_params=pltpu.CompilerParams(
            dimension_semantics=("parallel",),
        ),
    )(
        user_emb,
        item_flat,
        params["conv_kron"],
        params["conv_b_row"],
        params["w1"],
        params["b1"],
        params["ln_gamma"],
        params["ln_beta"],
        params["w2"],
        params["b2"],
    )
    return out[:B]


# --------------------------- deterministic init ---------------------------- #
def init_params(key, user_num, item_num, embedding_dim, hidden_dim, memory_size):
    ks = jax.random.split(key, 7)
    E, H, M = embedding_dim, hidden_dim, memory_size

    # Embedding tables stored in bf16 (gather bandwidth); compute stays f32.
    user_emb_table = 0.01 * jax.random.normal(ks[0], (user_num, E), jnp.float32)
    item_emb_table = 0.01 * jax.random.normal(ks[1], (item_num + 1, E), jnp.float32)
    item_emb_table = item_emb_table.at[item_num].set(0.0)     # padding_idx = item_num
    user_emb_table = user_emb_table.astype(jnp.bfloat16)
    item_emb_table = item_emb_table.astype(jnp.bfloat16)

    # drr_ave: Conv1d(M, 1, kernel_size=1): weight ~ U[0,1), bias zeroed (module init).
    conv_w = jax.random.uniform(ks[2], (1, M), jnp.float32)
    conv_b = jnp.zeros((1, 1), jnp.float32)
    # Precompute kron(conv_w, I_E): (M*E, E) so the conv is one K=M*E MXU matmul.
    conv_kron = (conv_w.reshape(M, 1, 1) * jnp.eye(E, dtype=jnp.float32)).reshape(M * E, E)
    conv_b_row = jnp.broadcast_to(conv_b.reshape(1, 1), (1, E)).astype(jnp.float32)

    # Linear(3E, H): kaiming_uniform; stored transposed as (3E, H).
    bound1 = float(jnp.sqrt(6.0 / (3 * E)))
    w1 = jax.random.uniform(ks[3], (3 * E, H), jnp.float32, -bound1, bound1)
    b1 = jax.random.uniform(
        ks[4], (1, H), jnp.float32, -1.0 / (3 * E) ** 0.5, 1.0 / (3 * E) ** 0.5
    )

    ln_gamma = jnp.ones((1, H), jnp.float32)
    ln_beta = jnp.zeros((1, H), jnp.float32)

    # Linear(H, E): kaiming_uniform; stored transposed as (H, E).
    bound2 = float(jnp.sqrt(6.0 / H))
    w2 = jax.random.uniform(ks[5], (H, E), jnp.float32, -bound2, bound2)
    b2 = jax.random.uniform(ks[6], (1, E), jnp.float32, -1.0 / H**0.5, 1.0 / H**0.5)

    return dict(
        user_emb_table=user_emb_table,
        item_emb_table=item_emb_table,
        conv_w=conv_w,
        conv_b=conv_b,
        conv_kron=conv_kron,
        conv_b_row=conv_b_row,
        w1=w1,
        b1=b1,
        ln_gamma=ln_gamma,
        ln_beta=ln_beta,
        w2=w2,
        b2=b2,
    )


# ------------------------------ reference --------------------------------- #
def actor_drr_reference(params, user, memory):
    user_emb = params["user_emb_table"][user].astype(jnp.float32)
    item_emb = params["item_emb_table"][memory].astype(jnp.float32)
    drr = jnp.einsum("bme,m->be", item_emb, params["conv_w"][0]) + params["conv_b"][0, 0]
    state = jnp.concatenate([user_emb, user_emb * drr, drr], axis=1)
    h = state @ params["w1"] + params["b1"]
    mean = jnp.mean(h, axis=-1, keepdims=True)
    var = jnp.mean((h - mean) ** 2, axis=-1, keepdims=True)
    h = (h - mean) * jax.lax.rsqrt(var + 1e-5) * params["ln_gamma"] + params["ln_beta"]
    h = jnp.maximum(h, 0.0)
    return h @ params["w2"] + params["b2"]


# --------------------------------- main ------------------------------------ #
if __name__ == "__main__":
    USER_NUM = 10
    ITEM_NUM = 20
    EMBEDDING_DIM = 16
    HIDDEN_DIM = 32
    MEMORY_SIZE = 8
    BATCH = 2

    key = jax.random.PRNGKey(0)
    pkey, ukey, mkey = jax.random.split(key, 3)

    params = init_params(pkey, USER_NUM, ITEM_NUM, EMBEDDING_DIM, HIDDEN_DIM, MEMORY_SIZE)

    user = jax.random.randint(ukey, (BATCH,), 0, USER_NUM, dtype=jnp.int32)
    # memory indices in [0, ITEM_NUM]; ITEM_NUM is the padding (zero-embedding) index
    memory = jax.random.randint(
        mkey, (BATCH, MEMORY_SIZE), 0, ITEM_NUM + 1, dtype=jnp.int32
    )

    fwd = jax.jit(actor_drr_forward)
    out = jax.block_until_ready(fwd(params, user, memory))

    ref = actor_drr_reference(params, user, memory)
    assert out.shape == (BATCH, EMBEDDING_DIM)
    assert jnp.allclose(out, ref, atol=1e-4, rtol=1e-4), "mismatch vs. reference"

    print("KERNEL_OK")
</pallas_src>

<mosaic_0001>
module attributes {stable_mosaic.version = 11 : i64} {
  func.func @_actor_drr_kernel(%arg0: i32, %arg1: memref<8x16xbf16, #tpu.memory_space<vmem>>, %arg2: memref<8x128xbf16, #tpu.memory_space<vmem>>, %arg3: memref<128x16xf32, #tpu.memory_space<vmem>>, %arg4: memref<1x16xf32, #tpu.memory_space<vmem>>, %arg5: memref<48x32xf32, #tpu.memory_space<vmem>>, %arg6: memref<1x32xf32, #tpu.memory_space<vmem>>, %arg7: memref<1x32xf32, #tpu.memory_space<vmem>>, %arg8: memref<1x32xf32, #tpu.memory_space<vmem>>, %arg9: memref<32x16xf32, #tpu.memory_space<vmem>>, %arg10: memref<1x16xf32, #tpu.memory_space<vmem>>, %arg11: memref<8x16xf32, #tpu.memory_space<vmem>>) attributes {dimension_semantics = [#tpu.dimension_semantics<parallel>], iteration_bounds = array<i64: 1>, scalar_prefetch = 0 : i64, scratch_operands = 0 : i64, tpu.core_type = #tpu.core_type<tc>, window_params = [{transform_indices = @transform_0, window_bounds = array<i64: 8, 16>}, {transform_indices = @transform_1, window_bounds = array<i64: 8, 128>}, {pipeline_mode = #tpu.pipeline_mode<synchronous>, transform_indices = @transform_2, window_bounds = array<i64: 128, 16>}, {pipeline_mode = #tpu.pipeline_mode<synchronous>, transform_indices = @transform_3, window_bounds = array<i64: 1, 16>}, {pipeline_mode = #tpu.pipeline_mode<synchronous>, transform_indices = @transform_4, window_bounds = array<i64: 48, 32>}, {pipeline_mode = #tpu.pipeline_mode<synchronous>, transform_indices = @transform_5, window_bounds = array<i64: 1, 32>}, {pipeline_mode = #tpu.pipeline_mode<synchronous>, transform_indices = @transform_6, window_bounds = array<i64: 1, 32>}, {pipeline_mode = #tpu.pipeline_mode<synchronous>, transform_indices = @transform_7, window_bounds = array<i64: 1, 32>}, {pipeline_mode = #tpu.pipeline_mode<synchronous>, transform_indices = @transform_8, window_bounds = array<i64: 32, 16>}, {pipeline_mode = #tpu.pipeline_mode<synchronous>, transform_indices = @transform_9, window_bounds = array<i64: 1, 16>}, {transform_indices = @transform_10, window_bounds = array<i64: 8, 16>}]} {
    %c0 = arith.constant 0 : index
    %c0_0 = arith.constant 0 : index
    %0 = vector.load %arg1[%c0, %c0_0] : memref<8x16xbf16, #tpu.memory_space<vmem>>, vector<8x16xbf16>
    %1 = arith.extf %0 : vector<8x16xbf16> to vector<8x16xf32>
    %c0_1 = arith.constant 0 : index
    %c0_2 = arith.constant 0 : index
    %2 = vector.load %arg2[%c0_1, %c0_2] : memref<8x128xbf16, #tpu.memory_space<vmem>>, vector<8x128xbf16>
    %3 = arith.extf %2 : vector<8x128xbf16> to vector<8x128xf32>
    %c0_3 = arith.constant 0 : index
    %c0_4 = arith.constant 0 : index
    %4 = vector.load %arg3[%c0_3, %c0_4] : memref<128x16xf32, #tpu.memory_space<vmem>>, vector<128x16xf32>
    %cst = arith.constant dense<0.000000e+00> : vector<8x16xf32>
    %5 = tpu.matmul %3, %4, %cst {dimension_numbers = #tpu.dot_dimension_numbers<[1], [0], [0], [1], [0, 0, 1, 1], [], []>} : vector<8x128xf32>, vector<128x16xf32>, vector<8x16xf32> -> vector<8x16xf32>
    %c0_5 = arith.constant 0 : index
    %c0_6 = arith.constant 0 : index
    %6 = vector.load %arg4[%c0_5, %c0_6] : memref<1x16xf32, #tpu.memory_space<vmem>>, vector<1x16xf32>
    %7 = vector.broadcast %6 : vector<1x16xf32> to vector<8x16xf32>
    %8 = arith.addf %5, %7 : vector<8x16xf32>
    %9 = arith.mulf %1, %8 : vector<8x16xf32>
    %10 = tpu.concatenate %1, %9, %8 in 1 : vector<8x16xf32>, vector<8x16xf32>, vector<8x16xf32> -> vector<8x48xf32>
    %c0_7 = arith.constant 0 : index
    %c0_8 = arith.constant 0 : index
    %11 = vector.load %arg5[%c0_7, %c0_8] : memref<48x32xf32, #tpu.memory_space<vmem>>, vector<48x32xf32>
    %cst_9 = arith.constant dense<0.000000e+00> : vector<8x32xf32>
    %12 = tpu.matmul %10, %11, %cst_9 {dimension_numbers = #tpu.dot_dimension_numbers<[1], [0], [0], [1], [0, 0, 1, 1], [], []>} : vector<8x48xf32>, vector<48x32xf32>, vector<8x32xf32> -> vector<8x32xf32>
    %c0_10 = arith.constant 0 : index
    %c0_11 = arith.constant 0 : index
    %13 = vector.load %arg6[%c0_10, %c0_11] : memref<1x32xf32, #tpu.memory_space<vmem>>, vector<1x32xf32>
    %14 = vector.broadcast %13 : vector<1x32xf32> to vector<8x32xf32>
    %15 = arith.addf %12, %14 : vector<8x32xf32>
    %cst_12 = arith.constant dense<0.000000e+00> : vector<8xf32>
    %16 = vector.multi_reduction <add>, %15, %cst_12 [1] : vector<8x32xf32> to vector<8xf32>
    %17 = vector.shape_cast %16 : vector<8xf32> to vector<8x1xf32>
    %cst_13 = arith.constant 3.200000e+01 : f32
    %18 = vector.broadcast %cst_13 : f32 to vector<8x1xf32>
    %19 = arith.divf %17, %18 : vector<8x1xf32>
    %20 = vector.broadcast %19 : vector<8x1xf32> to vector<8x32xf32>
    %21 = arith.subf %15, %20 : vector<8x32xf32>
    %22 = arith.mulf %21, %21 : vector<8x32xf32>
    %cst_14 = arith.constant dense<0.000000e+00> : vector<8xf32>
    %23 = vector.multi_reduction <add>, %22, %cst_14 [1] : vector<8x32xf32> to vector<8xf32>
    %24 = vector.shape_cast %23 : vector<8xf32> to vector<8x1xf32>
    %cst_15 = arith.constant 3.200000e+01 : f32
    %25 = vector.broadcast %cst_15 : f32 to vector<8x1xf32>
    %26 = arith.divf %24, %25 : vector<8x1xf32>
    %cst_16 = arith.constant 9.99999974E-6 : f32
    %27 = vector.broadcast %cst_16 : f32 to vector<8x1xf32>
    %28 = arith.addf %26, %27 : vector<8x1xf32>
    %29 = math.rsqrt %28 : vector<8x1xf32>
    %30 = vector.broadcast %29 : vector<8x1xf32> to vector<8x32xf32>
    %31 = arith.mulf %21, %30 : vector<8x32xf32>
    %c0_17 = arith.constant 0 : index
    %c0_18 = arith.constant 0 : index
    %32 = vector.load %arg7[%c0_17, %c0_18] : memref<1x32xf32, #tpu.memory_space<vmem>>, vector<1x32xf32>
    %33 = vector.broadcast %32 : vector<1x32xf32> to vector<8x32xf32>
    %34 = arith.mulf %31, %33 : vector<8x32xf32>
    %c0_19 = arith.constant 0 : index
    %c0_20 = arith.constant 0 : index
    %35 = vector.load %arg8[%c0_19, %c0_20] : memref<1x32xf32, #tpu.memory_space<vmem>>, vector<1x32xf32>
    %36 = vector.broadcast %35 : vector<1x32xf32> to vector<8x32xf32>
    %37 = arith.addf %34, %36 : vector<8x32xf32>
    %cst_21 = arith.constant 0.000000e+00 : f32
    %38 = vector.broadcast %cst_21 : f32 to vector<8x32xf32>
    %39 = arith.maximumf %37, %38 : vector<8x32xf32>
    %c0_22 = arith.constant 0 : index
    %c0_23 = arith.constant 0 : index
    %40 = vector.load %arg9[%c0_22, %c0_23] : memref<32x16xf32, #tpu.memory_space<vmem>>, vector<32x16xf32>
    %cst_24 = arith.constant dense<0.000000e+00> : vector<8x16xf32>
    %41 = tpu.matmul %39, %40, %cst_24 {dimension_numbers = #tpu.dot_dimension_numbers<[1], [0], [0], [1], [0, 0, 1, 1], [], []>} : vector<8x32xf32>, vector<32x16xf32>, vector<8x16xf32> -> vector<8x16xf32>
    %c0_25 = arith.constant 0 : index
    %c0_26 = arith.constant 0 : index
    %42 = vector.load %arg10[%c0_25, %c0_26] : memref<1x16xf32, #tpu.memory_space<vmem>>, vector<1x16xf32>
    %43 = vector.broadcast %42 : vector<1x16xf32> to vector<8x16xf32>
    %44 = arith.addf %41, %43 : vector<8x16xf32>
    %c0_27 = arith.constant 0 : index
    %c0_28 = arith.constant 0 : index
    %45 = vector.load %arg11[%c0_27, %c0_28] : memref<8x16xf32, #tpu.memory_space<vmem>>, vector<8x16xf32>
    tpu.vector_store %arg11[%c0_27, %c0_28], %44 {strides = array<i32>} : memref<8x16xf32, #tpu.memory_space<vmem>>, vector<8x16xf32>,
    return
  }
  func.func @transform_0(%arg0: i32) -> (i32, i32) {
    %c0_i32 = arith.constant 0 : i32
    %c0_i32_0 = arith.constant 0 : i32
    return %arg0, %c0_i32 : i32, i32
  }
  func.func @transform_1(%arg0: i32) -> (i32, i32) {
    %c0_i32 = arith.constant 0 : i32
    %c0_i32_0 = arith.constant 0 : i32
    return %arg0, %c0_i32 : i32, i32
  }
  func.func @transform_2(%arg0: i32) -> (i32, i32) {
    %c0_i32 = arith.constant 0 : i32
    %c0_i32_0 = arith.constant 0 : i32
    %c0_i32_1 = arith.constant 0 : i32
    return %c0_i32, %c0_i32_0 : i32, i32
  }
  func.func @transform_3(%arg0: i32) -> (i32, i32) {
    %c0_i32 = arith.constant 0 : i32
    %c0_i32_0 = arith.constant 0 : i32
    %c0_i32_1 = arith.constant 0 : i32
    return %c0_i32, %c0_i32_0 : i32, i32
  }
  func.func @transform_4(%arg0: i32) -> (i32, i32) {
    %c0_i32 = arith.constant 0 : i32
    %c0_i32_0 = arith.constant 0 : i32
    %c0_i32_1 = arith.constant 0 : i32
    return %c0_i32, %c0_i32_0 : i32, i32
  }
  func.func @transform_5(%arg0: i32) -> (i32, i32) {
    %c0_i32 = arith.constant 0 : i32
    %c0_i32_0 = arith.constant 0 : i32
    %c0_i32_1 = arith.constant 0 : i32
    return %c0_i32, %c0_i32_0 : i32, i32
  }
  func.func @transform_6(%arg0: i32) -> (i32, i32) {
    %c0_i32 = arith.constant 0 : i32
    %c0_i32_0 = arith.constant 0 : i32
    %c0_i32_1 = arith.constant 0 : i32
    return %c0_i32, %c0_i32_0 : i32, i32
  }
  func.func @transform_7(%arg0: i32) -> (i32, i32) {
    %c0_i32 = arith.constant 0 : i32
    %c0_i32_0 = arith.constant 0 : i32
    %c0_i32_1 = arith.constant 0 : i32
    return %c0_i32, %c0_i32_0 : i32, i32
  }
  func.func @transform_8(%arg0: i32) -> (i32, i32) {
    %c0_i32 = arith.constant 0 : i32
    %c0_i32_0 = arith.constant 0 : i32
    %c0_i32_1 = arith.constant 0 : i32
    return %c0_i32, %c0_i32_0 : i32, i32
  }
  func.func @transform_9(%arg0: i32) -> (i32, i32) {
    %c0_i32 = arith.constant 0 : i32
    %c0_i32_0 = arith.constant 0 : i32
    %c0_i32_1 = arith.constant 0 : i32
    return %c0_i32, %c0_i32_0 : i32, i32
  }
  func.func @transform_10(%arg0: i32) -> (i32, i32) {
    %c0_i32 = arith.constant 0 : i32
    %c0_i32_0 = arith.constant 0 : i32
    return %arg0, %c0_i32 : i32, i32
  }
}

</mosaic_0001>

<llo_original>
// kernel: actor_drr_forward.1
$region0: #{actor_drr_forward.1}
  #allocation0 [shape = 'u32[]', space=smem, size = 0x4, offset = 0x4, fixed_abs, tag = 'smem constant byte address 0x4 - core index']
  #allocation1 [shape = 'u32[72,128]{1,0:T(1,128)}', space=vmem, size = 0x9000, scoped, tag = 'internal scratch']
  %s0 = inlined_call_operand.vmem [shape: bf16[8,16], index: 0, kind: input, shape index: {}]
  %s1 = inlined_call_operand.vmem [shape: bf16[8,128], index: 1, kind: input, shape index: {}]
  %s2 = inlined_call_operand.vmem [shape: f32[128,16], index: 2, kind: input, shape index: {}]
  %s3 = inlined_call_operand.vmem [shape: f32[1,16], index: 3, kind: input, shape index: {}]
  %s4 = inlined_call_operand.vmem [shape: f32[48,32], index: 4, kind: input, shape index: {}]
  %s5 = inlined_call_operand.vmem [shape: f32[1,32], index: 5, kind: input, shape index: {}]
  %s6 = inlined_call_operand.vmem [shape: f32[1,32], index: 6, kind: input, shape index: {}]
  %s7 = inlined_call_operand.vmem [shape: f32[1,32], index: 7, kind: input, shape index: {}]
  %s8 = inlined_call_operand.vmem [shape: f32[32,16], index: 8, kind: input, shape index: {}]
  %s9 = inlined_call_operand.vmem [shape: f32[1,16], index: 9, kind: input, shape index: {}]
  %s10 = inlined_call_operand.vmem [shape: f32[8,16], index: 10, kind: output, shape index: {}]
  %s11 = sld [smem:[#allocation0]]
  $region50: #{actor_drr_forward.1} parent=0
    _
  %s13 = ssub.s32 1, %s11
  %s14 = scalar_select 0, %s13, %s11
  // Predicated region
  $region2: #{actor_drr_forward.1} parent=0 // pred_check
    _
  $region3: #{actor_drr_forward.1} parent=0 // pred_check_branch
    %16 = sbr.rel (0) target = $region5
  $region4: #{actor_drr_forward.1} parent=0 // pred_region
    _
  $region5: #{actor_drr_forward.1} parent=0 // pred_fallthru
    _
  // Predicated region
  $region6: #{actor_drr_forward.1} parent=0 // pred_check
    _
  $region7: #{actor_drr_forward.1} parent=0 // pred_check_branch
    %18 = sbr.rel (0) target = $region9
  $region8: #{actor_drr_forward.1} parent=0 // pred_region
    _
  $region9: #{actor_drr_forward.1} parent=0 // pred_fallthru
    _
  // Predicated region
  $region10: #{actor_drr_forward.1} parent=0 // pred_check
    _
  $region11: #{actor_drr_forward.1} parent=0 // pred_check_branch
    %20 = sbr.rel (0) target = $region13
  $region12: #{actor_drr_forward.1} parent=0 // pred_region
    _
  $region13: #{actor_drr_forward.1} parent=0 // pred_fallthru
    _
  // Predicated region
  $region14: #{actor_drr_forward.1} parent=0 // pred_check
    _
  $region15: #{actor_drr_forward.1} parent=0 // pred_check_branch
    %22 = sbr.rel (0) target = $region17
  $region16: #{actor_drr_forward.1} parent=0 // pred_region
    _
  $region17: #{actor_drr_forward.1} parent=0 // pred_fallthru
    _
  // Predicated region
  $region18: #{actor_drr_forward.1} parent=0 // pred_check
    _
  $region19: #{actor_drr_forward.1} parent=0 // pred_check_branch
    %24 = sbr.rel (0) target = $region21
  $region20: #{actor_drr_forward.1} parent=0 // pred_region
    _
  $region21: #{actor_drr_forward.1} parent=0 // pred_fallthru
    _
  // Predicated region
  $region22: #{actor_drr_forward.1} parent=0 // pred_check
    _
  $region23: #{actor_drr_forward.1} parent=0 // pred_check_branch
    %26 = sbr.rel (0) target = $region25
  $region24: #{actor_drr_forward.1} parent=0 // pred_region
    _
  $region25: #{actor_drr_forward.1} parent=0 // pred_fallthru
    _
  // Predicated region
  $region26: #{actor_drr_forward.1} parent=0 // pred_check
    _
  $region27: #{actor_drr_forward.1} parent=0 // pred_check_branch
    %28 = sbr.rel (0) target = $region29
  $region28: #{actor_drr_forward.1} parent=0 // pred_region
    _
  $region29: #{actor_drr_forward.1} parent=0 // pred_fallthru
    _
  // Predicated region
  $region30: #{actor_drr_forward.1} parent=0 // pred_check
    _
  $region31: #{actor_drr_forward.1} parent=0 // pred_check_branch
    %30 = sbr.rel (0) target = $region33
  $region32: #{actor_drr_forward.1} parent=0 // pred_region
    _
  $region33: #{actor_drr_forward.1} parent=0 // pred_fallthru
    _
  // Predicated region
  $region34: #{actor_drr_forward.1} parent=0 // pred_check
    _
  $region35: #{actor_drr_forward.1} parent=0 // pred_check_branch
    %32 = sbr.rel (0) target = $region37
  $region36: #{actor_drr_forward.1} parent=0 // pred_region
    _
  $region37: #{actor_drr_forward.1} parent=0 // pred_fallthru
    _
  // Predicated region
  $region38: #{actor_drr_forward.1} parent=0 // pred_check
    _
  $region39: #{actor_drr_forward.1} parent=0 // pred_check_branch
    %34 = sbr.rel (0) target = $region41
  $region40: #{actor_drr_forward.1} parent=0 // pred_region
    _
  $region41: #{actor_drr_forward.1} parent=0 // pred_fallthru
    _
  %v35 = vld [vmem:[%s0] sm:$0xf]
  %v36 = vunpack.c.l.bf16 %v35
  %v37 = vld [vmem:[%s1] sm:$0xf]
  %v38 = vunpack.c.l.bf16 %v37
  %v39 = vld [vmem:[%s2] sm:$0xff]
  %v40 = vld [vmem:[%s2 + $0x8] sm:$0xff]
  %v41 = vld [vmem:[%s2 + $0x10] sm:$0xff]
  %v42 = vld [vmem:[%s2 + $0x18] sm:$0xff]
  %v43 = vld [vmem:[%s2 + $0x20] sm:$0xff]
  %v44 = vld [vmem:[%s2 + $0x28] sm:$0xff]
  %v45 = vld [vmem:[%s2 + $0x30] sm:$0xff]
  %v46 = vld [vmem:[%s2 + $0x38] sm:$0xff]
  %v47 = vld [vmem:[%s2 + $0x40] sm:$0xff]
  %v48 = vld [vmem:[%s2 + $0x48] sm:$0xff]
  %v49 = vld [vmem:[%s2 + $0x50] sm:$0xff]
  %v50 = vld [vmem:[%s2 + $0x58] sm:$0xff]
  %v51 = vld [vmem:[%s2 + $0x60] sm:$0xff]
  %v52 = vld [vmem:[%s2 + $0x68] sm:$0xff]
  %v53 = vld [vmem:[%s2 + $0x70] sm:$0xff]
  %v54 = vld [vmem:[%s2 + $0x78] sm:$0xff]
  %v55 = vld [vmem:[%s3] sm:$0x1]
  %v57 = vperm.slane %v55, 0
  %59 = vmatpush.msra.mxu0 %v54
  %60 = vmatpush.msra.mxu0 %v53
  %61 = vmatpush.msra.mxu0 %v52
  %62 = vmatpush.msra.mxu0 %v51
  %63 = vmatpush.msra.mxu0 %v50
  %64 = vmatpush.msra.mxu0 %v49
  %65 = vmatpush.msra.mxu0 %v48
  %66 = vmatpush.msra.mxu0 %v47
  %67 = vmatpush.msra.mxu0 %v46
  %68 = vmatpush.msra.mxu0 %v45
  %69 = vmatpush.msra.mxu0 %v44
  %70 = vmatpush.msra.mxu0 %v43
  %71 = vmatpush.msra.mxu0 %v42
  %72 = vmatpush.msra.mxu0 %v41
  %73 = vmatpush.msra.mxu0 %v40
  %74 = vmatpush.msra.mxu0 %v39
  %75 = vmatmul.f32.gmra.mxu0 %v38
  %v76 = vpop.f32.mrf.mxu0
  %v77 = vadd.f32 %v57, %v76
  %78 = vdwg.mxu0
  %v79 = vmul.f32 %v36, %v77
  %81 = vrot.lane.b32.xlu0 %v79, 16
  %v82 = vpop.permute.xlu0 %81
  %85 = vrot.lane.b32.xlu0 %v77, 32
  %v86 = vpop.permute.xlu0 %85
  %vm88 = vcmask 130048
  %v89 = vsel %vm88, %v36, %v82
  %vm90 = vcmask 261120
  %v91 = vsel %vm90, %v89, %v86
  %v92 = vld [vmem:[%s4] sm:$0xff]
  %v93 = vld [vmem:[%s4 + $0x8] sm:$0xff]
  %v94 = vld [vmem:[%s4 + $0x10] sm:$0xff]
  %v95 = vld [vmem:[%s4 + $0x18] sm:$0xff]
  %v96 = vld [vmem:[%s4 + $0x20] sm:$0xff]
  %v97 = vld [vmem:[%s4 + $0x28] sm:$0xff]
  %v98 = vld [vmem:[%s5] sm:$0x1]
  %v100 = vperm.slane %v98, 0
  %vm102 = vcmask 392192
  %v104 = vsel %vm102, %v91, 0
  %106 = vmatpush.msra.mxu0 0.0
  %107 = vmatpush.msra.mxu0 0.0
  %108 = vmatpush.msra.mxu0 0.0
  %109 = vmatpush.msra.mxu0 0.0
  %110 = vmatpush.msra.mxu0 0.0
  %111 = vmatpush.msra.mxu0 0.0
  %112 = vmatpush.msra.mxu0 0.0
  %113 = vmatpush.msra.mxu0 0.0
  %114 = vmatpush.msra.mxu0 0.0
  %115 = vmatpush.msra.mxu0 0.0
  %116 = vmatpush.msra.mxu0 %v97
  %117 = vmatpush.msra.mxu0 %v96
  %118 = vmatpush.msra.mxu0 %v95
  %119 = vmatpush.msra.mxu0 %v94
  %120 = vmatpush.msra.mxu0 %v93
  %121 = vmatpush.msra.mxu0 %v92
  %122 = vmatmul.f32.gmra.mxu0 %v104
  %v123 = vpop.f32.mrf.mxu0
  %v124 = vadd.f32 %v100, %v123
  %125 = vdwg.mxu0
  %v126 = vsel %vm90, %v124, 0.0
  %127 = vadd.xlane.f32.xlu0 %v126
  %v128 = vpop.xlane.xlu0 %127
  %v129 = vrcp.pop 32.0
  %v130 = vmul.f32 32.0, %v129
  %v131 = vsub.f32 1.0, %v130
  %v132 = vmul.f32 %v129, %v131
  %v133 = vadd.f32 %v129, %v132
  %vm134 = vweird.f32 %v129
  %v135 = vsel %vm134, %v129, %v133
  %v136 = vmul.f32 %v128, %v135
  %v137 = vsub.f32 %v124, %v136
  %v138 = vmul.f32 %v137, %v137
  %v139 = vsel %vm90, %v138, 0.0
  %140 = vadd.xlane.f32.xlu0 %v139
  %v141 = vpop.xlane.xlu0 %140
  %v142 = vmul.f32 %v141, %v135
  %v143 = vadd.f32 %v142, 1e-05
  %v144 = vrsqrt.pop %v143
  %v145 = vmul.f32 %v144, %v143
  %v146 = vmul.f32 %v145, %v144
  %v147 = vmul.f32 0.5, %v146
  %v148 = vsub.f32 1.5, %v147
  %v149 = vmul.f32 %v144, %v148
  %vm150 = vweird.f32 %v143
  %vm151 = vweird.f32 %v144
  %vm152 = vmor %vm150, %vm151
  %v153 = vsel %vm152, %v144, %v149
  %v154 = vmul.f32 %v137, %v153
  %v155 = vld [vmem:[%s6] sm:$0x1]
  %v157 = vperm.slane %v155, 0
  %v159 = vmul.f32 %v154, %v157
  %v160 = vld [vmem:[%s7] sm:$0x1]
  %v162 = vperm.slane %v160, 0
  %v164 = vadd.f32 %v159, %v162
  %v165 = vmax.f32 %v164, 0.0
  %v166 = vld [vmem:[%s8] sm:$0xff]
  %v167 = vld [vmem:[%s8 + $0x8] sm:$0xff]
  %v168 = vld [vmem:[%s8 + $0x10] sm:$0xff]
  %v169 = vld [vmem:[%s8 + $0x18] sm:$0xff]
  %v170 = vld [vmem:[%s9] sm:$0x1]
  %v172 = vperm.slane %v170, 0
  %v175 = vsel %vm90, %v165, 0
  %177 = vmatpush.msra.mxu0 0.0
  %178 = vmatpush.msra.mxu0 0.0
  %179 = vmatpush.msra.mxu0 0.0
  %180 = vmatpush.msra.mxu0 0.0
  %181 = vmatpush.msra.mxu0 0.0
  %182 = vmatpush.msra.mxu0 0.0
  %183 = vmatpush.msra.mxu0 0.0
  %184 = vmatpush.msra.mxu0 0.0
  %185 = vmatpush.msra.mxu0 0.0
  %186 = vmatpush.msra.mxu0 0.0
  %187 = vmatpush.msra.mxu0 0.0
  %188 = vmatpush.msra.mxu0 0.0
  %189 = vmatpush.msra.mxu0 %v169
  %190 = vmatpush.msra.mxu0 %v168
  %191 = vmatpush.msra.mxu0 %v167
  %192 = vmatpush.msra.mxu0 %v166
  %193 = vmatmul.f32.gmra.mxu0 %v175
  %v194 = vpop.f32.mrf.mxu0
  %v195 = vadd.f32 %v172, %v194
  %196 = vdwg.mxu0
  %197 = vst.msk [vmem:[%s10] sm:$0xff] %vm88, %v195
  // Predicated region
  $region42: #{actor_drr_forward.1} parent=0 // pred_check
    _
  $region43: #{actor_drr_forward.1} parent=0 // pred_check_branch
    %199 = sbr.rel (0) target = $region45
  $region44: #{actor_drr_forward.1} parent=0 // pred_region
    _
  $region45: #{actor_drr_forward.1} parent=0 // pred_fallthru
    _
  // Predicated region
  $region46: #{actor_drr_forward.1} parent=0 // pred_check
    _
  $region47: #{actor_drr_forward.1} parent=0 // pred_check_branch
    %201 = sbr.rel (0) target = $region49
  $region48: #{actor_drr_forward.1} parent=0 // pred_region
    _
  $region49: #{actor_drr_forward.1} parent=0 // pred_fallthru
    _

</llo_original>
